<compile_context>
chip_gen: v7x
topology: tpu7x:2x2x1
jax: 0.10.0
libtpu: 0.0.40
codegen_flags: <defaults>
</compile_context>

<pallas_src>
import jax
import jax.numpy as jnp
from jax.experimental import pallas as pl
from jax.experimental.pallas import tpu as pltpu


def speakernet_kernel(x_ref, w1_ref, b1_ref, w2_ref, b2_ref, o_ref):
    # Fused: out = relu(x @ W1 + b1) @ W2 + b2
    # bf16 operands on the MXU, f32 accumulation, f32 bias/ReLU on the VPU.
    h = jnp.dot(x_ref[...], w1_ref[...], preferred_element_type=jnp.float32)
    h = jnp.maximum(h + b1_ref[...], 0.0)          # (TILE_N,H) + (1,H) broadcast
    o = jnp.dot(h.astype(w2_ref.dtype), w2_ref[...],
                preferred_element_type=jnp.float32)
    o_ref[...] = (o + b2_ref[...]).astype(o_ref.dtype)


def speakernet_forward(data, params, *, tile_n=128):
    """Mirrors SpeakerNet.forward(data, label=None).

    data: (..., L)  -> reshaped to (-1, L), embedded -> (N, D) float32
    """
    w1, b1, w2, b2 = params
    L = data.shape[-1]
    x = data.reshape(-1, L)                        # data.reshape(-1, data.size()[-1])
    N = x.shape[0]
    H = w1.shape[1]
    D = w2.shape[1]

    # bf16 operands for the MXU; accumulation stays f32 inside the kernel.
    x_bf = x.astype(jnp.bfloat16)
    w1_bf = w1.astype(jnp.bfloat16)
    w2_bf = w2.astype(jnp.bfloat16)
    b1_f32 = b1.astype(jnp.float32)
    b2_f32 = b2.astype(jnp.float32)

    # Pad flattened batch to a tile multiple so every block satisfies the
    # (8,128) rule and the grid divides exactly.  Pad rows are sliced off.
    n_tiles = pl.cdiv(N, tile_n)
    n_pad = n_tiles * tile_n
    if n_pad != N:
        x_bf = jnp.pad(x_bf, ((0, n_pad - N), (0, 0)))

    flops = 2 * n_pad * (L * H + H * D)
    bytes_accessed = (x_bf.size * 2 + w1_bf.size * 2 + w2_bf.size * 2
                      + b1_f32.size * 4 + b2_f32.size * 4 + n_pad * D * 4)

    out = pl.pallas_call(
        speakernet_kernel,
        out_shape=jax.ShapeDtypeStruct((n_pad, D), jnp.float32),
        grid=(n_tiles,),
        in_specs=[
            # Activations: tiled along N -> pipelined (prefetch i+1 while computing i).
            pl.BlockSpec((tile_n, L), lambda i: (i, 0)),
            # Weights / biases: constant index_map -> DMA'd once, VMEM-resident.
            pl.BlockSpec((L, H), lambda i: (0, 0)),
            pl.BlockSpec((1, H), lambda i: (0, 0)),
            pl.BlockSpec((H, D), lambda i: (0, 0)),
            pl.BlockSpec((1, D), lambda i: (0, 0)),
        ],
        out_specs=pl.BlockSpec((tile_n, D), lambda i: (i, 0)),
        compiler_params=pltpu.CompilerParams(
            dimension_semantics=("parallel",),
            vmem_limit_bytes=64 << 20),
        cost_estimate=pl.CostEstimate(
            flops=flops, transcendentals=0, bytes_accessed=bytes_accessed),
    )(x_bf, w1_bf, b1_f32, w2_bf, b2_f32)

    return out[:N]


def init_params(key, L, H, D):
    k1, k2, k3, k4 = jax.random.split(key, 4)
    w1 = jax.random.normal(k1, (L, H), jnp.float32) * (1.0 / jnp.sqrt(L))
    b1 = jax.random.normal(k2, (1, H), jnp.float32) * 0.01
    w2 = jax.random.normal(k3, (H, D), jnp.float32) * (1.0 / jnp.sqrt(H))
    b2 = jax.random.normal(k4, (1, D), jnp.float32) * 0.01
    return (w1, b1, w2, b2)


def reference_forward(data, params):
    # Mirrors the kernel's dtype path (bf16 operands, f32 accumulation).
    w1, b1, w2, b2 = params
    x = data.reshape(-1, data.shape[-1]).astype(jnp.bfloat16)
    h = jnp.dot(x, w1.astype(jnp.bfloat16), preferred_element_type=jnp.float32)
    h = jnp.maximum(h + b1, 0.0)
    o = jnp.dot(h.astype(jnp.bfloat16), w2.astype(jnp.bfloat16),
                preferred_element_type=jnp.float32)
    return o + b2


if __name__ == "__main__":
    key = jax.random.PRNGKey(0)
    kx, kp, kx2 = jax.random.split(key, 3)

    # Small shapes consistent with SpeakerNet.forward:
    # batch=2, nPerSpeaker=2, utterance length L=128 -> flattened N=4
    batch, n_per_speaker, L = 2, 2, 128
    H, D = 128, 128

    data = jax.random.normal(kx, (batch, n_per_speaker, L), jnp.float32)
    params = init_params(kp, L, H, D)

    out = speakernet_forward(data, params)
    out = jax.block_until_ready(out)
    ref = reference_forward(data, params)
    assert out.shape == (batch * n_per_speaker, D)
    assert jnp.allclose(out, ref, atol=2e-2, rtol=2e-2)

    # Second check exercising the multi-tile pipelined path (2 grid steps).
    data2 = jax.random.normal(kx2, (4, 64, L), jnp.float32)   # N = 256
    out2 = jax.block_until_ready(speakernet_forward(data2, params))
    ref2 = reference_forward(data2, params)
    assert out2.shape == (256, D)
    assert jnp.allclose(out2, ref2, atol=2e-2, rtol=2e-2)

    print("KERNEL_OK")
</pallas_src>

<mosaic_0001>
module attributes {stable_mosaic.version = 11 : i64} {
  func.func @speakernet_kernel(%arg0: i32, %arg1: memref<128x128xbf16, #tpu.memory_space<vmem>>, %arg2: memref<128x128xbf16, #tpu.memory_space<vmem>>, %arg3: memref<1x128xf32, #tpu.memory_space<vmem>>, %arg4: memref<128x128xbf16, #tpu.memory_space<vmem>>, %arg5: memref<1x128xf32, #tpu.memory_space<vmem>>, %arg6: memref<128x128xf32, #tpu.memory_space<vmem>>) attributes {dimension_semantics = [#tpu.dimension_semantics<parallel>], iteration_bounds = array<i64: 1>, scalar_prefetch = 0 : i64, scratch_operands = 0 : i64, tpu.core_type = #tpu.core_type<tc>, window_params = [{transform_indices = @transform_0, window_bounds = array<i64: 128, 128>}, {pipeline_mode = #tpu.pipeline_mode<synchronous>, transform_indices = @transform_1, window_bounds = array<i64: 128, 128>}, {pipeline_mode = #tpu.pipeline_mode<synchronous>, transform_indices = @transform_2, window_bounds = array<i64: 1, 128>}, {pipeline_mode = #tpu.pipeline_mode<synchronous>, transform_indices = @transform_3, window_bounds = array<i64: 128, 128>}, {pipeline_mode = #tpu.pipeline_mode<synchronous>, transform_indices = @transform_4, window_bounds = array<i64: 1, 128>}, {transform_indices = @transform_5, window_bounds = array<i64: 128, 128>}]} {
    %c0 = arith.constant 0 : index
    %c0_0 = arith.constant 0 : index
    %0 = vector.load %arg1[%c0, %c0_0] : memref<128x128xbf16, #tpu.memory_space<vmem>>, vector<128x128xbf16>
    %c0_1 = arith.constant 0 : index
    %c0_2 = arith.constant 0 : index
    %1 = vector.load %arg2[%c0_1, %c0_2] : memref<128x128xbf16, #tpu.memory_space<vmem>>, vector<128x128xbf16>
    %cst = arith.constant dense<0.000000e+00> : vector<128x128xf32>
    %2 = tpu.matmul %0, %1, %cst {dimension_numbers = #tpu.dot_dimension_numbers<[1], [0], [0], [1], [0, 0, 1, 1], [], []>} : vector<128x128xbf16>, vector<128x128xbf16>, vector<128x128xf32> -> vector<128x128xf32>
    %c0_3 = arith.constant 0 : index
    %c0_4 = arith.constant 0 : index
    %3 = vector.load %arg3[%c0_3, %c0_4] : memref<1x128xf32, #tpu.memory_space<vmem>>, vector<1x128xf32>
    %4 = vector.broadcast %3 : vector<1x128xf32> to vector<128x128xf32>
    %5 = arith.addf %2, %4 : vector<128x128xf32>
    %cst_5 = arith.constant 0.000000e+00 : f32
    %6 = vector.broadcast %cst_5 : f32 to vector<128x128xf32>
    %7 = arith.maximumf %5, %6 : vector<128x128xf32>
    %8 = arith.truncf %7 : vector<128x128xf32> to vector<128x128xbf16>
    %c0_6 = arith.constant 0 : index
    %c0_7 = arith.constant 0 : index
    %9 = vector.load %arg4[%c0_6, %c0_7] : memref<128x128xbf16, #tpu.memory_space<vmem>>, vector<128x128xbf16>
    %cst_8 = arith.constant dense<0.000000e+00> : vector<128x128xf32>
    %10 = tpu.matmul %8, %9, %cst_8 {dimension_numbers = #tpu.dot_dimension_numbers<[1], [0], [0], [1], [0, 0, 1, 1], [], []>} : vector<128x128xbf16>, vector<128x128xbf16>, vector<128x128xf32> -> vector<128x128xf32>
    %c0_9 = arith.constant 0 : index
    %c0_10 = arith.constant 0 : index
    %11 = vector.load %arg5[%c0_9, %c0_10] : memref<1x128xf32, #tpu.memory_space<vmem>>, vector<1x128xf32>
    %12 = vector.broadcast %11 : vector<1x128xf32> to vector<128x128xf32>
    %13 = arith.addf %10, %12 : vector<128x128xf32>
    %c0_11 = arith.constant 0 : index
    %c0_12 = arith.constant 0 : index
    %14 = vector.load %arg6[%c0_11, %c0_12] : memref<128x128xf32, #tpu.memory_space<vmem>>, vector<128x128xf32>
    tpu.vector_store %arg6[%c0_11, %c0_12], %13 {strides = array<i32>} : memref<128x128xf32, #tpu.memory_space<vmem>>, vector<128x128xf32>,
    return
  }
  func.func @transform_0(%arg0: i32) -> (i32, i32) {
    %c0_i32 = arith.constant 0 : i32
    %c0_i32_0 = arith.constant 0 : i32
    return %arg0, %c0_i32 : i32, i32
  }
  func.func @transform_1(%arg0: i32) -> (i32, i32) {
    %c0_i32 = arith.constant 0 : i32
    %c0_i32_0 = arith.constant 0 : i32
    %c0_i32_1 = arith.constant 0 : i32
    return %c0_i32, %c0_i32_0 : i32, i32
  }
  func.func @transform_2(%arg0: i32) -> (i32, i32) {
    %c0_i32 = arith.constant 0 : i32
    %c0_i32_0 = arith.constant 0 : i32
    %c0_i32_1 = arith.constant 0 : i32
    return %c0_i32, %c0_i32_0 : i32, i32
  }
  func.func @transform_3(%arg0: i32) -> (i32, i32) {
    %c0_i32 = arith.constant 0 : i32
    %c0_i32_0 = arith.constant 0 : i32
    %c0_i32_1 = arith.constant 0 : i32
    return %c0_i32, %c0_i32_0 : i32, i32
  }
  func.func @transform_4(%arg0: i32) -> (i32, i32) {
    %c0_i32 = arith.constant 0 : i32
    %c0_i32_0 = arith.constant 0 : i32
    %c0_i32_1 = arith.constant 0 : i32
    return %c0_i32, %c0_i32_0 : i32, i32
  }
  func.func @transform_5(%arg0: i32) -> (i32, i32) {
    %c0_i32 = arith.constant 0 : i32
    %c0_i32_0 = arith.constant 0 : i32
    return %arg0, %c0_i32 : i32, i32
  }
}

</mosaic_0001>

<llo_original>
// kernel: tpu_custom_call.1
$region0: #{tpu_custom_call.1}
  #allocation0 [shape = 'u32[]', space=smem, size = 0x4, offset = 0x4, fixed_abs, tag = 'smem constant byte address 0x4 - core index']
  #allocation1 [shape = 'u32[144,128]{1,0:T(1,128)}', space=vmem, size = 0x12000, scoped, tag = 'internal scratch']
  %s0 = inlined_call_operand.hbm [shape: bf16[128,128], index: 0, kind: input, shape index: {}]
  %s1 = inlined_call_operand.hbm [shape: bf16[128,128], index: 1, kind: input, shape index: {}]
  %s2 = inlined_call_operand.hbm [shape: f32[1,128], index: 2, kind: input, shape index: {}]
  %s3 = inlined_call_operand.hbm [shape: bf16[128,128], index: 3, kind: input, shape index: {}]
  %s4 = inlined_call_operand.hbm [shape: f32[1,128], index: 4, kind: input, shape index: {}]
  %s5 = inlined_call_operand.hbm [shape: f32[128,128], index: 5, kind: output, shape index: {}]
  %s6 = sld [smem:[#allocation0]]
  $region50: #{tpu_custom_call.1} parent=0
    _
  %s8 = ssub.s32 1, %s6
  %s9 = scalar_select 0, %s8, %s6
  $region1: #{tpu_custom_call.1} parent=0
    #allocation2 [shape = 'u8[32768]{0}', space=vmem, size = 0x8000, scoped, tag = 'input window, operand 0, single buffered']
    #allocation3 [shape = 's32[1]{0}', space=sflag, size = 0x4, scoped, tag = 'scoped memory for tpu_custom_call.1']
    #allocation4 [shape = 's32[1]{0}', space=sflag, size = 0x4, scoped, tag = 'scoped memory for tpu_custom_call.1']
    #allocation5 [shape = 'u8[32768]{0}', space=vmem, size = 0x8000, scoped, tag = 'input window, operand 1, single buffered']
    #allocation6 [shape = 's32[1]{0}', space=sflag, size = 0x4, scoped, tag = 'scoped memory for tpu_custom_call.1']
    #allocation7 [shape = 'u8[512]{0}', space=vmem, size = 0x400, scoped, tag = 'input window, operand 2, single buffered']
    #allocation8 [shape = 'u8[32768]{0}', space=vmem, size = 0x8000, scoped, tag = 'input window, operand 3, single buffered']
    #allocation9 [shape = 's32[1]{0}', space=sflag, size = 0x4, scoped, tag = 'scoped memory for tpu_custom_call.1']
    #allocation10 [shape = 'u8[512]{0}', space=vmem, size = 0x400, scoped, tag = 'input window, operand 4, single buffered']
    #allocation11 [shape = 'u8[65536]{0}', space=vmem, size = 0x10000, scoped, tag = 'output window, operand 0, single buffered']
    %10 = vsyncpa [#allocation3], 0
    %11 = vsyncpa [#allocation6], 0
    %12 = vsyncpa [#allocation9], 0
    %13 = vsyncpa [#allocation4], 0
    // Predicated region
    $region2: #{tpu_custom_call.1} parent=1 // pred_check
      _
    $region3: #{tpu_custom_call.1} parent=1 // pred_check_branch
      %15 = sbr.rel (0) target = $region5
    $region4: #{tpu_custom_call.1} parent=1 // pred_region
      %s17 = ssub.s32 1024, 1024
      %18 = vsyncadd [#allocation3], %s17
      %s19 = sshll.u32 [#allocation2], 4
      %s20 = int_to_ptr.vmem [resolvable:$true] %s19
      %25 = dma.hbm_to_vmem [thread:$0]  %s0, 1024, %s20, [#allocation3], 64, 64, 4
    $region5: #{tpu_custom_call.1} parent=1 // pred_fallthru
      _
    // Predicated region
    $region6: #{tpu_custom_call.1} parent=1 // pred_check
      _
    $region7: #{tpu_custom_call.1} parent=1 // pred_check_branch
      %27 = sbr.rel (0) target = $region9
    $region8: #{tpu_custom_call.1} parent=1 // pred_region
      %s29 = ssub.s32 1024, 1024
      %30 = vsyncadd [#allocation6], %s29
      %s31 = sshll.u32 [#allocation5], 4
      %s32 = int_to_ptr.vmem [resolvable:$true] %s31
      %37 = dma.hbm_to_vmem [thread:$0]  %s1, 1024, %s32, [#allocation6], 64, 64, 4
    $region9: #{tpu_custom_call.1} parent=1 // pred_fallthru
      _
    // Predicated region
    $region10: #{tpu_custom_call.1} parent=1 // pred_check
      _
    $region11: #{tpu_custom_call.1} parent=1 // pred_check_branch
      %39 = sbr.rel (0) target = $region13
    $region12: #{tpu_custom_call.1} parent=1 // pred_region
      %s41 = ssub.s32 16, 16
      %42 = vsyncadd [#allocation6], %s41
      %s44 = sshll.u32 [#allocation7], 4
      %s45 = int_to_ptr.vmem [resolvable:$true] %s44
      %47 = dma.hbm_to_vmem [thread:$0]  %s2, 16, %s45, [#allocation6]
    $region13: #{tpu_custom_call.1} parent=1 // pred_fallthru
      _
    // Predicated region
    $region14: #{tpu_custom_call.1} parent=1 // pred_check
      _
    $region15: #{tpu_custom_call.1} parent=1 // pred_check_branch
      %49 = sbr.rel (0) target = $region17
    $region16: #{tpu_custom_call.1} parent=1 // pred_region
      %s51 = ssub.s32 1024, 1024
      %52 = vsyncadd [#allocation9], %s51
      %s53 = sshll.u32 [#allocation8], 4
      %s54 = int_to_ptr.vmem [resolvable:$true] %s53
      %59 = dma.hbm_to_vmem [thread:$0]  %s3, 1024, %s54, [#allocation9], 64, 64, 4
    $region17: #{tpu_custom_call.1} parent=1 // pred_fallthru
      _
    // Predicated region
    $region18: #{tpu_custom_call.1} parent=1 // pred_check
      _
    $region19: #{tpu_custom_call.1} parent=1 // pred_check_branch
      %61 = sbr.rel (0) target = $region21
    $region20: #{tpu_custom_call.1} parent=1 // pred_region
      %s63 = ssub.s32 16, 16
      %64 = vsyncadd [#allocation9], %s63
      %s66 = sshll.u32 [#allocation10], 4
      %s67 = int_to_ptr.vmem [resolvable:$true] %s66
      %69 = dma.hbm_to_vmem [thread:$0]  %s4, 16, %s67, [#allocation9]
    $region21: #{tpu_custom_call.1} parent=1 // pred_fallthru
      _
    // Predicated region
    $region22: #{tpu_custom_call.1} parent=1 // pred_check
      _
    $region23: #{tpu_custom_call.1} parent=1 // pred_check_branch
      %71 = sbr.rel (0) target = $region25
    $region24: #{tpu_custom_call.1} parent=1 // pred_region
      %72 = dma.done [#allocation3], 1024
    $region25: #{tpu_custom_call.1} parent=1 // pred_fallthru
      _
    // Predicated region
    $region26: #{tpu_custom_call.1} parent=1 // pred_check
      _
    $region27: #{tpu_custom_call.1} parent=1 // pred_check_branch
      %74 = sbr.rel (0) target = $region29
    $region28: #{tpu_custom_call.1} parent=1 // pred_region
      %75 = dma.done [#allocation6], 1024
    $region29: #{tpu_custom_call.1} parent=1 // pred_fallthru
      _
    // Predicated region
    $region30: #{tpu_custom_call.1} parent=1 // pred_check
      _
    $region31: #{tpu_custom_call.1} parent=1 // pred_check_branch
      %77 = sbr.rel (0) target = $region33
    $region32: #{tpu_custom_call.1} parent=1 // pred_region
      %78 = dma.done [#allocation6], 16
    $region33: #{tpu_custom_call.1} parent=1 // pred_fallthru
      _
    // Predicated region
    $region34: #{tpu_custom_call.1} parent=1 // pred_check
      _
    $region35: #{tpu_custom_call.1} parent=1 // pred_check_branch
      %80 = sbr.rel (0) target = $region37
    $region36: #{tpu_custom_call.1} parent=1 // pred_region
      %81 = dma.done [#allocation9], 1024
    $region37: #{tpu_custom_call.1} parent=1 // pred_fallthru
      _
    // Predicated region
    $region38: #{tpu_custom_call.1} parent=1 // pred_check
      _
    $region39: #{tpu_custom_call.1} parent=1 // pred_check_branch
      %83 = sbr.rel (0) target = $region41
    $region40: #{tpu_custom_call.1} parent=1 // pred_region
      %84 = dma.done [#allocation9], 16
    $region41: #{tpu_custom_call.1} parent=1 // pred_fallthru
      _
    %v86 = vld [vmem:[#allocation2] sm:$0xf]
    %v87 = vld [vmem:[#allocation2 + $0x4] sm:$0xf]
    %v88 = vld [vmem:[#allocation2 + $0x8] sm:$0xf]
    %v89 = vld [vmem:[#allocation2 + $0xc] sm:$0xf]
    %v90 = vld [vmem:[#allocation2 + $0x10] sm:$0xf]
    %v91 = vld [vmem:[#allocation2 + $0x14] sm:$0xf]
    %v92 = vld [vmem:[#allocation2 + $0x18] sm:$0xf]
    %v93 = vld [vmem:[#allocation2 + $0x1c] sm:$0xf]
    %v94 = vld [vmem:[#allocation2 + $0x20] sm:$0xf]
    %v95 = vld [vmem:[#allocation2 + $0x24] sm:$0xf]
    %v96 = vld [vmem:[#allocation2 + $0x28] sm:$0xf]
    %v97 = vld [vmem:[#allocation2 + $0x2c] sm:$0xf]
    %v98 = vld [vmem:[#allocation2 + $0x30] sm:$0xf]
    %v99 = vld [vmem:[#allocation2 + $0x34] sm:$0xf]
    %v100 = vld [vmem:[#allocation2 + $0x38] sm:$0xf]
    %v101 = vld [vmem:[#allocation2 + $0x3c] sm:$0xf]
    %v102 = vld [vmem:[#allocation5] sm:$0xf]
    %v103 = vld [vmem:[#allocation5 + $0x4] sm:$0xf]
    %v104 = vld [vmem:[#allocation5 + $0x8] sm:$0xf]
    %v105 = vld [vmem:[#allocation5 + $0xc] sm:$0xf]
    %v106 = vld [vmem:[#allocation5 + $0x10] sm:$0xf]
    %v107 = vld [vmem:[#allocation5 + $0x14] sm:$0xf]
    %v108 = vld [vmem:[#allocation5 + $0x18] sm:$0xf]
    %v109 = vld [vmem:[#allocation5 + $0x1c] sm:$0xf]
    %v110 = vld [vmem:[#allocation5 + $0x20] sm:$0xf]
    %v111 = vld [vmem:[#allocation5 + $0x24] sm:$0xf]
    %v112 = vld [vmem:[#allocation5 + $0x28] sm:$0xf]
    %v113 = vld [vmem:[#allocation5 + $0x2c] sm:$0xf]
    %v114 = vld [vmem:[#allocation5 + $0x30] sm:$0xf]
    %v115 = vld [vmem:[#allocation5 + $0x34] sm:$0xf]
    %v116 = vld [vmem:[#allocation5 + $0x38] sm:$0xf]
    %v117 = vld [vmem:[#allocation5 + $0x3c] sm:$0xf]
    %v118 = vld [vmem:[#allocation7] sm:$0x1]
    %v120 = vlaneseq
    %v121 = vshrl.u32 %v120, 7
    %v122 = vsub.s32 0, %v121
    %v123 = vrot.slane %v118, %v122
    %v141 = vunpack.c.l.b16 %v86
    %v142 = vunpack.c.l.b16 %v87
    %v143 = vunpack.c.l.b16 %v88
    %v144 = vunpack.c.l.b16 %v89
    %v145 = vunpack.c.l.b16 %v90
    %v146 = vunpack.c.l.b16 %v91
    %v147 = vunpack.c.l.b16 %v92
    %v148 = vunpack.c.l.b16 %v93
    %v149 = vunpack.c.l.b16 %v94
    %v150 = vunpack.c.l.b16 %v95
    %v151 = vunpack.c.l.b16 %v96
    %v152 = vunpack.c.l.b16 %v97
    %v153 = vunpack.c.l.b16 %v98
    %v154 = vunpack.c.l.b16 %v99
    %v155 = vunpack.c.l.b16 %v100
    %v156 = vunpack.c.l.b16 %v101
    %v157 = vpack.c.b16 %v142, %v141
    %v158 = vpack.c.b16 %v144, %v143
    %v159 = vpack.c.b16 %v146, %v145
    %v160 = vpack.c.b16 %v148, %v147
    %v161 = vpack.c.b16 %v150, %v149
    %v162 = vpack.c.b16 %v152, %v151
    %v163 = vpack.c.b16 %v154, %v153
    %v164 = vpack.c.b16 %v156, %v155
    %v189 = vunpack.c.l.b16 %v102
    %v190 = vunpack.c.l.b16 %v103
    %v191 = vunpack.c.l.b16 %v104
    %v192 = vunpack.c.l.b16 %v105
    %v193 = vunpack.c.l.b16 %v106
    %v194 = vunpack.c.l.b16 %v107
    %v195 = vunpack.c.l.b16 %v108
    %v196 = vunpack.c.l.b16 %v109
    %v197 = vunpack.c.l.b16 %v110
    %v198 = vunpack.c.l.b16 %v111
    %v199 = vunpack.c.l.b16 %v112
    %v200 = vunpack.c.l.b16 %v113
    %v201 = vunpack.c.l.b16 %v114
    %v202 = vunpack.c.l.b16 %v115
    %v203 = vunpack.c.l.b16 %v116
    %v204 = vunpack.c.l.b16 %v117
    %v205 = vpack.c.b16 %v190, %v189
    %v206 = vpack.c.b16 %v192, %v191
    %v207 = vpack.c.b16 %v194, %v193
    %v208 = vpack.c.b16 %v196, %v195
    %v209 = vpack.c.b16 %v198, %v197
    %v210 = vpack.c.b16 %v200, %v199
    %v211 = vpack.c.b16 %v202, %v201
    %v212 = vpack.c.b16 %v204, %v203
    %221 = vmatprep.subr.bf16.mxu0 0
    %222 = vmatpush1.bf16.msra.mxu0 %v205
    %223 = vmatprep.subr.bf16.mxu0 0
    %224 = vmatpush1.bf16.msra.mxu0 %v206
    %225 = vmatprep.subr.bf16.mxu0 0
    %226 = vmatpush1.bf16.msra.mxu0 %v207
    %227 = vmatprep.subr.bf16.mxu0 0
    %228 = vmatpush1.bf16.msra.mxu0 %v208
    %229 = vmatprep.subr.bf16.mxu0 0
    %230 = vmatpush1.bf16.msra.mxu0 %v209
    %231 = vmatprep.subr.bf16.mxu0 0
    %232 = vmatpush1.bf16.msra.mxu0 %v210
    %233 = vmatprep.subr.bf16.mxu0 0
    %234 = vmatpush1.bf16.msra.mxu0 %v211
    %235 = vmatprep.subr.bf16.mxu0 0
    %236 = vmatpush1.bf16.msra.mxu0 %v212
    %237 = vmatprep.subr.bf16.mxu0 0
    %238 = vmatpush1.bf16.msra.mxu0 0
    %239 = vmatprep.subr.bf16.mxu0 0
    %240 = vmatpush1.bf16.msra.mxu0 0
    %241 = vmatprep.subr.bf16.mxu0 0
    %242 = vmatpush1.bf16.msra.mxu0 0
    %243 = vmatprep.subr.bf16.mxu0 0
    %244 = vmatpush1.bf16.msra.mxu0 0
    %245 = vmatprep.subr.bf16.mxu0 0
    %246 = vmatpush1.bf16.msra.mxu0 0
    %247 = vmatprep.subr.bf16.mxu0 0
    %248 = vmatpush1.bf16.msra.mxu0 0
    %249 = vmatprep.subr.bf16.mxu0 0
    %250 = vmatpush1.bf16.msra.mxu0 0
    %251 = vmatprep.subr.bf16.mxu0 0
    %252 = vmatpush1.bf16.msra.mxu0 0
    %253 = vmatprep.mubr.bf16.mxu0 0
    %254 = vmatmul.mubr.bf16.gmra.mrb[0].mxu0 %v157
    %v255 = vpop.f32.mrb[0].mxu0
    %v256 = vadd.f32 %v123, %v255
    %v257 = vpop.f32.mrb[0].mxu0
    %v258 = vpop.f32.mrb[0].mxu0
    %v259 = vadd.f32 %v123, %v258
    %v260 = vpop.f32.mrb[0].mxu0
    %261 = vmatprep.mubr.bf16.mxu0 0
    %262 = vmatmul.mubr.bf16.gmra.mrb[0].mxu0 %v158
    %v263 = vpop.f32.mrb[0].mxu0
    %v264 = vadd.f32 %v123, %v263
    %v265 = vpop.f32.mrb[0].mxu0
    %v266 = vpop.f32.mrb[0].mxu0
    %v267 = vadd.f32 %v123, %v266
    %v268 = vpop.f32.mrb[0].mxu0
    %269 = vmatprep.mubr.bf16.mxu0 0
    %270 = vmatmul.mubr.bf16.gmra.mrb[0].mxu0 %v159
    %v271 = vpop.f32.mrb[0].mxu0
    %v272 = vadd.f32 %v123, %v271
    %v273 = vpop.f32.mrb[0].mxu0
    %v274 = vpop.f32.mrb[0].mxu0
    %v275 = vadd.f32 %v123, %v274
    %v276 = vpop.f32.mrb[0].mxu0
    %277 = vmatprep.mubr.bf16.mxu0 0
    %278 = vmatmul.mubr.bf16.gmra.mrb[0].mxu0 %v160
    %v279 = vpop.f32.mrb[0].mxu0
    %v280 = vadd.f32 %v123, %v279
    %v281 = vpop.f32.mrb[0].mxu0
    %v282 = vpop.f32.mrb[0].mxu0
    %v283 = vadd.f32 %v123, %v282
    %v284 = vpop.f32.mrb[0].mxu0
    %285 = vmatprep.mubr.bf16.mxu0 0
    %286 = vmatmul.mubr.bf16.gmra.mrb[0].mxu0 %v161
    %v287 = vpop.f32.mrb[0].mxu0
    %v288 = vadd.f32 %v123, %v287
    %v289 = vpop.f32.mrb[0].mxu0
    %v290 = vpop.f32.mrb[0].mxu0
    %v291 = vadd.f32 %v123, %v290
    %v292 = vpop.f32.mrb[0].mxu0
    %293 = vmatprep.mubr.bf16.mxu0 0
    %294 = vmatmul.mubr.bf16.gmra.mrb[0].mxu0 %v162
    %v295 = vpop.f32.mrb[0].mxu0
    %v296 = vadd.f32 %v123, %v295
    %v297 = vpop.f32.mrb[0].mxu0
    %v298 = vpop.f32.mrb[0].mxu0
    %v299 = vadd.f32 %v123, %v298
    %v300 = vpop.f32.mrb[0].mxu0
    %301 = vmatprep.mubr.bf16.mxu0 0
    %302 = vmatmul.mubr.bf16.gmra.mrb[0].mxu0 %v163
    %v303 = vpop.f32.mrb[0].mxu0
    %v304 = vadd.f32 %v123, %v303
    %v305 = vpop.f32.mrb[0].mxu0
    %v306 = vpop.f32.mrb[0].mxu0
    %v307 = vadd.f32 %v123, %v306
    %v308 = vpop.f32.mrb[0].mxu0
    %309 = vmatprep.mubr.bf16.mxu0 0
    %310 = vmatmul.mubr.bf16.gmra.mrb[0].mxu0 %v164
    %v311 = vpop.f32.mrb[0].mxu0
    %v312 = vadd.f32 %v123, %v311
    %v313 = vpop.f32.mrb[0].mxu0
    %v314 = vpop.f32.mrb[0].mxu0
    %v315 = vadd.f32 %v123, %v314
    %v316 = vpop.f32.mrb[0].mxu0
    %317 = vdwg.mxu0
    %v318 = vmax.f32 %v256, 0.0
    %v319 = vmax.f32 %v259, 0.0
    %v320 = vmax.f32 %v264, 0.0
    %v321 = vmax.f32 %v267, 0.0
    %v322 = vmax.f32 %v272, 0.0
    %v323 = vmax.f32 %v275, 0.0
    %v324 = vmax.f32 %v280, 0.0
    %v325 = vmax.f32 %v283, 0.0
    %v326 = vmax.f32 %v288, 0.0
    %v327 = vmax.f32 %v291, 0.0
    %v328 = vmax.f32 %v296, 0.0
    %v329 = vmax.f32 %v299, 0.0
    %v330 = vmax.f32 %v304, 0.0
    %v331 = vmax.f32 %v307, 0.0
    %v332 = vmax.f32 %v312, 0.0
    %v333 = vmax.f32 %v315, 0.0
    %v334 = vpack.c.bf16 %v319, %v318
    %v335 = vpack.c.bf16 %v321, %v320
    %v336 = vpack.c.bf16 %v323, %v322
    %v337 = vpack.c.bf16 %v325, %v324
    %v338 = vpack.c.bf16 %v327, %v326
    %v339 = vpack.c.bf16 %v329, %v328
    %v340 = vpack.c.bf16 %v331, %v330
    %v341 = vpack.c.bf16 %v333, %v332
    %v342 = vld [vmem:[#allocation8] sm:$0xf]
    %v343 = vld [vmem:[#allocation8 + $0x4] sm:$0xf]
    %v344 = vld [vmem:[#allocation8 + $0x8] sm:$0xf]
    %v345 = vld [vmem:[#allocation8 + $0xc] sm:$0xf]
    %v346 = vld [vmem:[#allocation8 + $0x10] sm:$0xf]
    %v347 = vld [vmem:[#allocation8 + $0x14] sm:$0xf]
    %v348 = vld [vmem:[#allocation8 + $0x18] sm:$0xf]
    %v349 = vld [vmem:[#allocation8 + $0x1c] sm:$0xf]
    %v350 = vld [vmem:[#allocation8 + $0x20] sm:$0xf]
    %v351 = vld [vmem:[#allocation8 + $0x24] sm:$0xf]
    %v352 = vld [vmem:[#allocation8 + $0x28] sm:$0xf]
    %v353 = vld [vmem:[#allocation8 + $0x2c] sm:$0xf]
    %v354 = vld [vmem:[#allocation8 + $0x30] sm:$0xf]
    %v355 = vld [vmem:[#allocation8 + $0x34] sm:$0xf]
    %v356 = vld [vmem:[#allocation8 + $0x38] sm:$0xf]
    %v357 = vld [vmem:[#allocation8 + $0x3c] sm:$0xf]
    %v358 = vld [vmem:[#allocation10] sm:$0x1]
    %v360 = vlaneseq
    %v361 = vshrl.u32 %v360, 7
    %v362 = vsub.s32 0, %v361
    %v363 = vrot.slane %v358, %v362
    %v381 = vunpack.c.l.b16 %v342
    %v382 = vunpack.c.l.b16 %v343
    %v383 = vunpack.c.l.b16 %v344
    %v384 = vunpack.c.l.b16 %v345
    %v385 = vunpack.c.l.b16 %v346
    %v386 = vunpack.c.l.b16 %v347
    %v387 = vunpack.c.l.b16 %v348
    %v388 = vunpack.c.l.b16 %v349
    %v389 = vunpack.c.l.b16 %v350
    %v390 = vunpack.c.l.b16 %v351
    %v391 = vunpack.c.l.b16 %v352
    %v392 = vunpack.c.l.b16 %v353
    %v393 = vunpack.c.l.b16 %v354
    %v394 = vunpack.c.l.b16 %v355
    %v395 = vunpack.c.l.b16 %v356
    %v396 = vunpack.c.l.b16 %v357
    %v397 = vpack.c.b16 %v382, %v381
    %v398 = vpack.c.b16 %v384, %v383
    %v399 = vpack.c.b16 %v386, %v385
    %v400 = vpack.c.b16 %v388, %v387
    %v401 = vpack.c.b16 %v390, %v389
    %v402 = vpack.c.b16 %v392, %v391
    %v403 = vpack.c.b16 %v394, %v393
    %v404 = vpack.c.b16 %v396, %v395
    %413 = vmatprep.subr.bf16.mxu0 0
    %414 = vmatpush1.bf16.msra.mxu0 %v397
    %415 = vmatprep.subr.bf16.mxu0 0
    %416 = vmatpush1.bf16.msra.mxu0 %v398
    %417 = vmatprep.subr.bf16.mxu0 0
    %418 = vmatpush1.bf16.msra.mxu0 %v399
    %419 = vmatprep.subr.bf16.mxu0 0
    %420 = vmatpush1.bf16.msra.mxu0 %v400
    %421 = vmatprep.subr.bf16.mxu0 0
    %422 = vmatpush1.bf16.msra.mxu0 %v401
    %423 = vmatprep.subr.bf16.mxu0 0
    %424 = vmatpush1.bf16.msra.mxu0 %v402
    %425 = vmatprep.subr.bf16.mxu0 0
    %426 = vmatpush1.bf16.msra.mxu0 %v403
    %427 = vmatprep.subr.bf16.mxu0 0
    %428 = vmatpush1.bf16.msra.mxu0 %v404
    %429 = vmatprep.subr.bf16.mxu0 0
    %430 = vmatpush1.bf16.msra.mxu0 0
    %431 = vmatprep.subr.bf16.mxu0 0
    %432 = vmatpush1.bf16.msra.mxu0 0
    %433 = vmatprep.subr.bf16.mxu0 0
    %434 = vmatpush1.bf16.msra.mxu0 0
    %435 = vmatprep.subr.bf16.mxu0 0
    %436 = vmatpush1.bf16.msra.mxu0 0
    %437 = vmatprep.subr.bf16.mxu0 0
    %438 = vmatpush1.bf16.msra.mxu0 0
    %439 = vmatprep.subr.bf16.mxu0 0
    %440 = vmatpush1.bf16.msra.mxu0 0
    %441 = vmatprep.subr.bf16.mxu0 0
    %442 = vmatpush1.bf16.msra.mxu0 0
    %443 = vmatprep.subr.bf16.mxu0 0
    %444 = vmatpush1.bf16.msra.mxu0 0
    %445 = vmatprep.mubr.bf16.mxu0 0
    %446 = vmatmul.mubr.bf16.gmra.mrb[0].mxu0 %v334
    %v447 = vpop.f32.mrb[0].mxu0
    %v448 = vadd.f32 %v363, %v447
    %v449 = vpop.f32.mrb[0].mxu0
    %v450 = vpop.f32.mrb[0].mxu0
    %v451 = vadd.f32 %v363, %v450
    %v452 = vpop.f32.mrb[0].mxu0
    %453 = vmatprep.mubr.bf16.mxu0 0
    %454 = vmatmul.mubr.bf16.gmra.mrb[0].mxu0 %v335
    %v455 = vpop.f32.mrb[0].mxu0
    %v456 = vadd.f32 %v363, %v455
    %v457 = vpop.f32.mrb[0].mxu0
    %v458 = vpop.f32.mrb[0].mxu0
    %v459 = vadd.f32 %v363, %v458
    %v460 = vpop.f32.mrb[0].mxu0
    %461 = vmatprep.mubr.bf16.mxu0 0
    %462 = vmatmul.mubr.bf16.gmra.mrb[0].mxu0 %v336
    %v463 = vpop.f32.mrb[0].mxu0
    %v464 = vadd.f32 %v363, %v463
    %v465 = vpop.f32.mrb[0].mxu0
    %v466 = vpop.f32.mrb[0].mxu0
    %v467 = vadd.f32 %v363, %v466
    %v468 = vpop.f32.mrb[0].mxu0
    %469 = vmatprep.mubr.bf16.mxu0 0
    %470 = vmatmul.mubr.bf16.gmra.mrb[0].mxu0 %v337
    %v471 = vpop.f32.mrb[0].mxu0
    %v472 = vadd.f32 %v363, %v471
    %v473 = vpop.f32.mrb[0].mxu0
    %v474 = vpop.f32.mrb[0].mxu0
    %v475 = vadd.f32 %v363, %v474
    %v476 = vpop.f32.mrb[0].mxu0
    %477 = vmatprep.mubr.bf16.mxu0 0
    %478 = vmatmul.mubr.bf16.gmra.mrb[0].mxu0 %v338
    %v479 = vpop.f32.mrb[0].mxu0
    %v480 = vadd.f32 %v363, %v479
    %v481 = vpop.f32.mrb[0].mxu0
    %v482 = vpop.f32.mrb[0].mxu0
    %v483 = vadd.f32 %v363, %v482
    %v484 = vpop.f32.mrb[0].mxu0
    %485 = vmatprep.mubr.bf16.mxu0 0
    %486 = vmatmul.mubr.bf16.gmra.mrb[0].mxu0 %v339
    %v487 = vpop.f32.mrb[0].mxu0
    %v488 = vadd.f32 %v363, %v487
    %v489 = vpop.f32.mrb[0].mxu0
    %v490 = vpop.f32.mrb[0].mxu0
    %v491 = vadd.f32 %v363, %v490
    %v492 = vpop.f32.mrb[0].mxu0
    %493 = vmatprep.mubr.bf16.mxu0 0
    %494 = vmatmul.mubr.bf16.gmra.mrb[0].mxu0 %v340
    %v495 = vpop.f32.mrb[0].mxu0
    %v496 = vadd.f32 %v363, %v495
    %v497 = vpop.f32.mrb[0].mxu0
    %v498 = vpop.f32.mrb[0].mxu0
    %v499 = vadd.f32 %v363, %v498
    %v500 = vpop.f32.mrb[0].mxu0
    %501 = vmatprep.mubr.bf16.mxu0 0
    %502 = vmatmul.mubr.bf16.gmra.mrb[0].mxu0 %v341
    %v503 = vpop.f32.mrb[0].mxu0
    %v504 = vadd.f32 %v363, %v503
    %v505 = vpop.f32.mrb[0].mxu0
    %v506 = vpop.f32.mrb[0].mxu0
    %v507 = vadd.f32 %v363, %v506
    %v508 = vpop.f32.mrb[0].mxu0
    %509 = vdwg.mxu0
    %510 = vst [vmem:[#allocation11] sm:$0xff] %v448
    %511 = vst [vmem:[#allocation11 + $0x8] sm:$0xff] %v451
    %512 = vst [vmem:[#allocation11 + $0x10] sm:$0xff] %v456
    %513 = vst [vmem:[#allocation11 + $0x18] sm:$0xff] %v459
    %514 = vst [vmem:[#allocation11 + $0x20] sm:$0xff] %v464
    %515 = vst [vmem:[#allocation11 + $0x28] sm:$0xff] %v467
    %516 = vst [vmem:[#allocation11 + $0x30] sm:$0xff] %v472
    %517 = vst [vmem:[#allocation11 + $0x38] sm:$0xff] %v475
    %518 = vst [vmem:[#allocation11 + $0x40] sm:$0xff] %v480
    %519 = vst [vmem:[#allocation11 + $0x48] sm:$0xff] %v483
    %520 = vst [vmem:[#allocation11 + $0x50] sm:$0xff] %v488
    %521 = vst [vmem:[#allocation11 + $0x58] sm:$0xff] %v491
    %522 = vst [vmem:[#allocation11 + $0x60] sm:$0xff] %v496
    %523 = vst [vmem:[#allocation11 + $0x68] sm:$0xff] %v499
    %524 = vst [vmem:[#allocation11 + $0x70] sm:$0xff] %v504
    %525 = vst [vmem:[#allocation11 + $0x78] sm:$0xff] %v507
    // Predicated region
    $region42: #{tpu_custom_call.1} parent=1 // pred_check
      _
    $region43: #{tpu_custom_call.1} parent=1 // pred_check_branch
      %527 = sbr.rel (0) target = $region45
    $region44: #{tpu_custom_call.1} parent=1 // pred_region
      %s529 = ssub.s32 2048, 2048
      %530 = vsyncadd [#allocation4], %s529
      %s531 = sshll.u32 [#allocation11], 4
      %s532 = int_to_ptr.vmem [resolvable:$true] %s531
      %537 = dma.vmem_to_hbm [thread:$0]  %s532, 2048, %s5, [#allocation4], 128, 128, 8
    $region45: #{tpu_custom_call.1} parent=1 // pred_fallthru
      _
    // Predicated region
    $region46: #{tpu_custom_call.1} parent=1 // pred_check
      _
    $region47: #{tpu_custom_call.1} parent=1 // pred_check_branch
      %539 = sbr.rel (0) target = $region49
    $region48: #{tpu_custom_call.1} parent=1 // pred_region
      %540 = dma.done [#allocation4], 2048
    $region49: #{tpu_custom_call.1} parent=1 // pred_fallthru
      _
    %541 = vsyncpa [#allocation3], 1
    %542 = vsyncpa [#allocation6], 1
    %543 = vsyncpa [#allocation9], 1
    %544 = vsyncpa [#allocation4], 1

</llo_original>
